<compile_context>
chip_gen: v7x
topology: tpu7x:2x2x1
jax: 0.10.0
libtpu: 0.0.40
codegen_flags: <defaults>
</compile_context>

<pallas_src>
import functools

import numpy as np
import jax
import jax.numpy as jnp
from jax.experimental import pallas as pl
from jax.experimental.pallas import tpu as pltpu


def make_positional_encoding(d_model: int, max_len: int = 32) -> jnp.ndarray:
    """Deterministic sinusoidal PE table, identical math to the torch module."""
    position = np.arange(0, max_len, dtype=np.float32)[:, None]          # (max_len, 1)
    div_term = np.exp(np.arange(0, d_model, 2, dtype=np.float32)
                      * (-np.log(10000.0) / d_model))                    # (d_model/2,)
    pe = np.zeros((max_len, d_model), dtype=np.float32)
    pe[:, 0::2] = np.sin(position * div_term)
    pe[:, 1::2] = np.cos(position * div_term)
    return jnp.asarray(pe[None, :, :])                                   # (1, max_len, d_model)


def _sublane_pack(itemsize: int) -> int:
    # Sub-32-bit dtypes pack along sublanes: 8 (f32), 16 (bf16), 32 (int8).
    return max(8, 32 // itemsize)


def _choose_fold(B: int, S: int, D: int, pack: int) -> int:
    """Factor G of S folded into the row axis so rows = B*G fills the sublanes."""
    if B >= pack or S <= 1:
        return 1
    divisors = [g for g in range(1, S + 1) if S % g == 0]
    good = [g for g in divisors if pack <= B * g <= 4 * pack]
    if good:
        def score(g):
            lanes = (S // g) * D
            return (0 if lanes % 128 == 0 else 1,       # keep lanes 128-aligned
                    0 if (B * g) % pack == 0 else 1,     # fill sublane packing
                    g)                                   # smallest fold wins
        return min(good, key=score)
    under = [g for g in divisors if B * g <= 4 * pack]
    return under[-1] if under else 1


def _choose_tiling(n_rows: int, n_lanes: int, itemsize: int, pack: int, fold: int):
    """Pick (row_block, lane_block) targeting ~4 MiB lane-dense tiles."""
    TILE_BYTES_MAX = 4 << 20       # safe for double-buffered in+out on v7x
    MEGACORE_MIN_BYTES = 1 << 20   # below this a (1,1) grid is fine
    total_bytes = n_rows * n_lanes * itemsize

    if total_bytes <= TILE_BYTES_MAX:
        row_block, lane_block = n_rows, n_lanes
    elif fold > 1:
        # Folded rows are small (< 4*pack): keep them whole, tile lanes.
        row_block = n_rows
        lane_block = (TILE_BYTES_MAX // (row_block * itemsize)) // 128 * 128
        lane_block = max(128, min(lane_block, n_lanes))
    else:
        full_lane_rows = TILE_BYTES_MAX // (n_lanes * itemsize)
        if full_lane_rows >= pack:
            # Lane axis fits whole: tile rows only (sublane-aligned).
            row_block = min(n_rows, (full_lane_rows // pack) * pack)
            lane_block = n_lanes
        else:
            # Both axes large: a handful of sublane-aligned rows, lanes tiled
            # in multiples of 128 to fill the byte budget.
            row_block = min(n_rows, 8 * pack)
            row_block = max(pack, (row_block // pack) * pack)
            lane_block = (TILE_BYTES_MAX // (row_block * itemsize)) // 128 * 128
            lane_block = max(128, min(lane_block, n_lanes))

    # v7x megacore: guarantee >=2 grid steps along a parallel axis for
    # non-tiny inputs so both TensorCores share the HBM bandwidth.
    n_row_blocks = -(-n_rows // row_block)
    n_lane_blocks = -(-n_lanes // lane_block)
    if total_bytes > MEGACORE_MIN_BYTES and n_row_blocks * n_lane_blocks < 2:
        if n_lanes >= 256:
            lane_block = max(128, ((n_lanes // 2) // 128) * 128)
        elif fold == 1 and n_rows >= 2 * pack:
            row_block = max(pack, ((n_rows // 2) // pack) * pack)
    return row_block, lane_block


def _add_pe_kernel(x_ref, pe_ref, o_ref):
    # x_ref / o_ref: (row_block, lane_block) tile of the flattened input/output.
    # pe_ref:        (G, lane_block) tile of the folded PE table; broadcast with
    #                period G over rows (plain jnp broadcast when G == 1).
    x = x_ref[...].astype(jnp.float32)
    pe = pe_ref[...].astype(jnp.float32)
    if 1 < pe.shape[0] < x.shape[0]:
        pe = jnp.tile(pe, (x.shape[0] // pe.shape[0], 1))
    o_ref[...] = (x + pe).astype(o_ref.dtype)


@functools.partial(jax.jit, donate_argnums=(0,))
def positional_encoding_forward(x: jnp.ndarray, pe: jnp.ndarray) -> jnp.ndarray:
    """x: (B, S, D); pe: (1, max_len, D). Returns x + pe[:, :S, :] (in place over x).

    WARNING: x's buffer is donated and overwritten; do not read x afterwards.
    """
    B, S, D = x.shape
    max_len = pe.shape[1]
    if S > max_len:
        raise ValueError(f"sequence length {S} exceeds max_len {max_len}")

    itemsize = jnp.dtype(x.dtype).itemsize
    pack = _sublane_pack(itemsize)
    G = _choose_fold(B, S, D, pack)
    rows = B * G
    lanes = (S // G) * D

    # Lane-dense 2-D views. pe stays f32; the add is done in f32 in-kernel and
    # cast back to x.dtype (output dtype follows x because of the aliasing).
    x2 = x.reshape(rows, lanes)
    pe2 = pe[0, :S, :].reshape(G, lanes)

    row_block, lane_block = _choose_tiling(rows, lanes, itemsize, pack, G)
    # Lane axis outermost, row axis innermost: the pe block index stays constant
    # across consecutive grid steps, so its tile is not re-DMA'd.
    grid = (pl.cdiv(lanes, lane_block), pl.cdiv(rows, row_block))

    x_bytes = B * S * D * itemsize
    pe_bytes = S * D * jnp.dtype(pe.dtype).itemsize

    out2 = pl.pallas_call(
        _add_pe_kernel,
        out_shape=jax.ShapeDtypeStruct((rows, lanes), x.dtype),
        grid=grid,
        in_specs=[
            pl.BlockSpec((row_block, lane_block), lambda li, ri: (ri, li)),
            pl.BlockSpec((G, lane_block), lambda li, ri: (0, li)),
        ],
        out_specs=pl.BlockSpec((row_block, lane_block), lambda li, ri: (ri, li)),
        # PE add result overwrites x: skip the separate HBM output buffer.
        input_output_aliases={0: 0},
        cost_estimate=pl.CostEstimate(
            flops=B * S * D,
            transcendentals=0,
            bytes_accessed=2 * x_bytes + pe_bytes,
        ),
        compiler_params=pltpu.CompilerParams(
            dimension_semantics=("parallel", "parallel"),
            vmem_limit_bytes=48 * 1024 * 1024,
        ),
    )(x2, pe2)

    return out2.reshape(B, S, D)


if __name__ == "__main__":
    # Small shapes consistent with the module: batch=2, seq=8, d_model=32, max_len=32.
    B, S, D, MAX_LEN = 2, 8, 32, 32

    key = jax.random.PRNGKey(0)
    x = jax.random.normal(key, (B, S, D), dtype=jnp.float32)
    pe = make_positional_encoding(D, MAX_LEN)

    # Reference computed BEFORE the kernel call: x's buffer is donated to the
    # kernel (in-place add), so it must not be read afterwards.
    ref = np.asarray(x + pe[:, :S, :])

    out = positional_encoding_forward(x, pe)
    out = jax.block_until_ready(out)

    np.testing.assert_allclose(np.asarray(out), ref, rtol=1e-6, atol=1e-6)
    print("KERNEL_OK")
</pallas_src>

<mosaic_0001>
module attributes {stable_mosaic.version = 11 : i64} {
  func.func @_add_pe_kernel(%arg0: i32, %arg1: i32, %arg2: memref<8x64xf32, #tpu.memory_space<vmem>>, %arg3: memref<4x64xf32, #tpu.memory_space<vmem>>, %arg4: memref<8x64xf32, #tpu.memory_space<vmem>>) attributes {dimension_semantics = [#tpu.dimension_semantics<parallel>, #tpu.dimension_semantics<parallel>], iteration_bounds = array<i64: 1, 1>, scalar_prefetch = 0 : i64, scratch_operands = 0 : i64, tpu.core_type = #tpu.core_type<tc>, window_params = [{transform_indices = @transform_0, window_bounds = array<i64: 8, 64>}, {transform_indices = @transform_1, window_bounds = array<i64: 4, 64>}, {transform_indices = @transform_2, window_bounds = array<i64: 8, 64>}]} {
    %c0 = arith.constant 0 : index
    %c0_0 = arith.constant 0 : index
    %0 = vector.load %arg2[%c0, %c0_0] : memref<8x64xf32, #tpu.memory_space<vmem>>, vector<8x64xf32>
    %c0_1 = arith.constant 0 : index
    %c0_2 = arith.constant 0 : index
    %1 = vector.load %arg3[%c0_1, %c0_2] : memref<4x64xf32, #tpu.memory_space<vmem>>, vector<4x64xf32>
    %2 = tpu.concatenate %1, %1 in 0 : vector<4x64xf32>, vector<4x64xf32> -> vector<8x64xf32>
    %3 = arith.addf %0, %2 : vector<8x64xf32>
    %c0_3 = arith.constant 0 : index
    %c0_4 = arith.constant 0 : index
    %4 = vector.load %arg4[%c0_3, %c0_4] : memref<8x64xf32, #tpu.memory_space<vmem>>, vector<8x64xf32>
    tpu.vector_store %arg4[%c0_3, %c0_4], %3 {strides = array<i32>} : memref<8x64xf32, #tpu.memory_space<vmem>>, vector<8x64xf32>,
    return
  }
  func.func @transform_0(%arg0: i32, %arg1: i32) -> (i32, i32) {
    %c0_i32 = arith.constant 0 : i32
    return %arg1, %arg0 : i32, i32
  }
  func.func @transform_1(%arg0: i32, %arg1: i32) -> (i32, i32) {
    %c0_i32 = arith.constant 0 : i32
    %c0_i32_0 = arith.constant 0 : i32
    return %c0_i32, %arg0 : i32, i32
  }
  func.func @transform_2(%arg0: i32, %arg1: i32) -> (i32, i32) {
    %c0_i32 = arith.constant 0 : i32
    return %arg1, %arg0 : i32, i32
  }
}

</mosaic_0001>

<llo_original>
// kernel: squeeze.1
$region0: #{squeeze.1}
  %s0 = inlined_call_operand.vmem [shape: f32[1,8,32], index: 0, kind: input, shape index: {}]
  %s1 = inlined_call_operand.vmem [shape: f32[4,64], index: 1, kind: output, shape index: {}]
  $region1: #{squeeze.1} parent=0
    #allocation0 [shape = 'u8[4096]{0}', space=vmem, size = 0x1000, scoped, tag = 'scoped mem for output reshape']
    %v2 = vld [vmem:[%s0] ss:$2 sm:$0xf]
    %vm3 = vcmask 261120
    %4 = vst.msk [vmem:[#allocation0] sm:$0xf] %vm3, %v2
    %s5 = scalar_lea.vmem %s0, 1
    %v6 = vld [vmem:[%s5] ss:$2 sm:$0xf]
    %7 = vrot.lane.b32.xlu0 %v6, 32
    %v8 = vpop.permute.xlu0 %7
    %vm9 = vcmask 523520
    %10 = vst.msk [vmem:[#allocation0] sm:$0xf] %vm9, %v8
    %s12 = sshllo.u32 0, 4
    %v14 = vld [vmem:[#allocation0] sm:%s12]
    %s15 = sshllo.u32 0, 4
    %16 = vst [vmem:[%s1] sm:%s15] %v14

// kernel: positional_encoding_forward.1
$region0: #{positional_encoding_forward.1}
  #allocation0 [shape = 'u32[]', space=smem, size = 0x4, offset = 0x4, fixed_abs, tag = 'smem constant byte address 0x4 - core index']
  #allocation1 [shape = 'u32[144,128]{1,0:T(1,128)}', space=vmem, size = 0x12000, scoped, tag = 'internal scratch']
  %s0 = inlined_call_operand.vmem [shape: f32[8,64], index: 0, kind: input, shape index: {}, may-alias: {0,2}]
  %s1 = inlined_call_operand.vmem [shape: f32[4,64], index: 1, kind: input, shape index: {}]
  %s2 = inlined_call_operand.vmem [shape: f32[8,64], index: 2, kind: output, shape index: {}, may-alias: {0,2}]
  %s3 = sld [smem:[#allocation0]]
  $region18: #{positional_encoding_forward.1} parent=0
    _
  %s5 = ssub.s32 1, %s3
  %s6 = scalar_select 0, %s5, %s3
  // Predicated region
  $region2: #{positional_encoding_forward.1} parent=0 // pred_check
    _
  $region3: #{positional_encoding_forward.1} parent=0 // pred_check_branch
    %8 = sbr.rel (0) target = $region5
  $region4: #{positional_encoding_forward.1} parent=0 // pred_region
    _
  $region5: #{positional_encoding_forward.1} parent=0 // pred_fallthru
    _
  // Predicated region
  $region6: #{positional_encoding_forward.1} parent=0 // pred_check
    _
  $region7: #{positional_encoding_forward.1} parent=0 // pred_check_branch
    %10 = sbr.rel (0) target = $region9
  $region8: #{positional_encoding_forward.1} parent=0 // pred_region
    _
  $region9: #{positional_encoding_forward.1} parent=0 // pred_fallthru
    _
  %v11 = vld [vmem:[%s0] sm:$0xff]
  %v12 = vld [vmem:[%s1] sm:$0xf]
  %v14 = vrot.slane %v12, 4
  %vm16 = vcmask 1043456
  %v17 = vsel %vm16, %v12, %v14
  %v18 = vadd.f32 %v11, %v17
  %vm19 = vcmask 523264
  %20 = vst.msk [vmem:[%s2] sm:$0xff] %vm19, %v18
  // Predicated region
  $region10: #{positional_encoding_forward.1} parent=0 // pred_check
    _
  $region11: #{positional_encoding_forward.1} parent=0 // pred_check_branch
    %22 = sbr.rel (0) target = $region13
  $region12: #{positional_encoding_forward.1} parent=0 // pred_region
    _
  $region13: #{positional_encoding_forward.1} parent=0 // pred_fallthru
    _
  // Predicated region
  $region14: #{positional_encoding_forward.1} parent=0 // pred_check
    _
  $region15: #{positional_encoding_forward.1} parent=0 // pred_check_branch
    %24 = sbr.rel (0) target = $region17
  $region16: #{positional_encoding_forward.1} parent=0 // pred_region
    _
  $region17: #{positional_encoding_forward.1} parent=0 // pred_fallthru
    _

</llo_original>
